<compile_context>
chip_gen: v7x
topology: tpu7x:2x2x1
jax: 0.10.0
libtpu: 0.0.40
codegen_flags: <defaults>
</compile_context>

<pallas_src>
import functools

import jax
import jax.numpy as jnp
from jax.experimental import pallas as pl
from jax.experimental.pallas import tpu as pltpu

BN_EPS = 1e-5


def _round_up(x, m):
    return (x + m - 1) // m * m


def _block_vmem_bytes(shape, dtype=jnp.float32):
    """(8,128)-padded VMEM footprint of one f32 block, in bytes."""
    dims = list(shape)
    dims[-1] = _round_up(dims[-1], 128)
    if len(dims) >= 2:
        dims[-2] = _round_up(dims[-2], 8)
    n = 1
    for d in dims:
        n *= d
    return n * jnp.dtype(dtype).itemsize


def _vmem_limit(block_shapes):
    # ~2x the resident tiles (double buffering) + floor for internal scratch.
    total = sum(_block_vmem_bytes(s) for s in block_shapes)
    return max(4 * 1024 * 1024, 2 * total)


def linear1_stats_kernel(x_ref, w1_ref, h_ref, sum_ref, sumsq_ref):
    """Per batch tile: h = x @ W1 (b1 dropped — cancelled by BN mean), and
    accumulate per-feature sum / sum-of-squares across the batch grid axis."""

    @pl.when(pl.program_id(0) == 0)
    def _():
        sum_ref[...] = jnp.zeros_like(sum_ref)
        sumsq_ref[...] = jnp.zeros_like(sumsq_ref)

    # TODO(synk): at production shapes, optionally cast x/W1 (and emb/W2 in
    # pass 2) to bfloat16 for the MXU, keeping f32 accumulation and f32 BN.
    h = jnp.dot(x_ref[...], w1_ref[...], preferred_element_type=jnp.float32)
    h_ref[...] = h
    sum_ref[...] += jnp.sum(h, axis=0, keepdims=True)
    sumsq_ref[...] += jnp.sum(h * h, axis=0, keepdims=True)


def bn_relu_linear2_kernel(h_ref, sum_ref, sumsq_ref, gamma_ref, beta_ref,
                           w2_ref, b2_ref, out_ref, emb_ref, *, inv_b):
    """BatchNorm (folded scale/shift) + ReLU + layer2 per batch tile."""
    # (1, hidden) vector math only; the (TB, hidden) tensor then sees exactly
    # one fused multiply-add instead of sub-mean/mul-rsqrt/mul-gamma/add-beta.
    mean = sum_ref[...] * inv_b
    var = sumsq_ref[...] * inv_b - mean * mean
    scale = gamma_ref[...] * jax.lax.rsqrt(var + BN_EPS)
    shift = beta_ref[...] - mean * scale

    emb = jnp.maximum(h_ref[...] * scale + shift, 0.0)
    emb_ref[...] = emb
    out_ref[...] = (jnp.dot(emb, w2_ref[...],
                            preferred_element_type=jnp.float32) + b2_ref[...])


def mlp_forward(x, w1, b1, gamma, beta, w2, b2):
    """Forward of the num_layers==1 MLP. Returns (out, emb).

    b1 is accepted for parity with the PyTorch module but not used: with
    train-mode BatchNorm immediately after layer1, the bias is exactly
    cancelled by the batch-mean subtraction (zero effect on emb and out).
    """
    del b1  # mathematically a no-op under training-mode BatchNorm1d

    B, in_dim = x.shape
    hidden = w1.shape[1]
    out_dim = w2.shape[1]

    # ---- batch tiling (BN stats require full, unpadded tiles) ----
    TB = 128 if B % 128 == 0 else B
    # TODO(synk): mask partial batch tiles in the BN statistics if B is ever
    # not a multiple of the tile size.
    assert B % TB == 0
    num_bt = B // TB

    # ---- lane-dense output: pad out features up to a multiple of 128 ----
    out_pad = _round_up(out_dim, 128)
    if out_pad != out_dim:
        w2 = jnp.pad(w2, ((0, 0), (0, out_pad - out_dim)))
        b2 = jnp.pad(b2, ((0, 0), (0, out_pad - out_dim)))

    # ---- pass 1: layer1 matmul + batch statistics (reduction over tiles) ----
    vmem1 = _vmem_limit([(TB, in_dim), (in_dim, hidden), (TB, hidden),
                         (1, hidden), (1, hidden)])
    h, h_sum, h_sumsq = pl.pallas_call(
        linear1_stats_kernel,
        grid=(num_bt,),
        in_specs=[
            pl.BlockSpec((TB, in_dim), lambda i: (i, 0)),       # x tile
            pl.BlockSpec((in_dim, hidden), lambda i: (0, 0)),   # W1 resident
        ],
        out_specs=(
            pl.BlockSpec((TB, hidden), lambda i: (i, 0)),       # h tile
            pl.BlockSpec((1, hidden), lambda i: (0, 0)),        # sum (accum)
            pl.BlockSpec((1, hidden), lambda i: (0, 0)),        # sumsq (accum)
        ),
        out_shape=(
            jax.ShapeDtypeStruct((B, hidden), jnp.float32),
            jax.ShapeDtypeStruct((1, hidden), jnp.float32),
            jax.ShapeDtypeStruct((1, hidden), jnp.float32),
        ),
        compiler_params=pltpu.CompilerParams(
            dimension_semantics=("arbitrary",),   # stats accumulate over tiles
            vmem_limit_bytes=vmem1),
    )(x, w1)

    # ---- pass 2: BN (scale/shift) + ReLU + layer2, parallel over tiles ----
    vmem2 = _vmem_limit([(TB, hidden), (1, hidden), (1, hidden), (1, hidden),
                         (1, hidden), (hidden, out_pad), (1, out_pad),
                         (TB, out_pad), (TB, hidden)])
    out_padded, emb = pl.pallas_call(
        functools.partial(bn_relu_linear2_kernel, inv_b=1.0 / B),
        grid=(num_bt,),
        in_specs=[
            pl.BlockSpec((TB, hidden), lambda i: (i, 0)),        # h tile
            pl.BlockSpec((1, hidden), lambda i: (0, 0)),         # sum
            pl.BlockSpec((1, hidden), lambda i: (0, 0)),         # sumsq
            pl.BlockSpec((1, hidden), lambda i: (0, 0)),         # gamma
            pl.BlockSpec((1, hidden), lambda i: (0, 0)),         # beta
            pl.BlockSpec((hidden, out_pad), lambda i: (0, 0)),   # W2 resident
            pl.BlockSpec((1, out_pad), lambda i: (0, 0)),        # b2
        ],
        out_specs=(
            pl.BlockSpec((TB, out_pad), lambda i: (i, 0)),       # out (lane-dense)
            pl.BlockSpec((TB, hidden), lambda i: (i, 0)),        # emb
        ),
        out_shape=(
            jax.ShapeDtypeStruct((B, out_pad), jnp.float32),
            jax.ShapeDtypeStruct((B, hidden), jnp.float32),
        ),
        compiler_params=pltpu.CompilerParams(
            dimension_semantics=("parallel",),    # independent batch tiles
            vmem_limit_bytes=vmem2),
    )(h, h_sum, h_sumsq, gamma, beta, w2, b2)

    return out_padded[:, :out_dim], emb


def reference_forward(x, w1, b1, gamma, beta, w2, b2):
    """Plain-JAX reference, including b1 (proves the in-kernel cancellation)."""
    h = x @ w1 + b1
    mean = jnp.mean(h, axis=0, keepdims=True)
    var = jnp.mean((h - mean) ** 2, axis=0, keepdims=True)
    h = (h - mean) * jax.lax.rsqrt(var + BN_EPS) * gamma + beta
    h = jnp.maximum(h, 0.0)
    return h @ w2 + b2, h


if __name__ == "__main__":
    # Small shapes consistent with the module (num_layers == 1 path):
    # batch=8, in_dim=32, hidden_dim=[128], out_dim=64.
    B, in_dim, hidden, out_dim = 8, 32, 128, 64

    key = jax.random.PRNGKey(0)
    kx, kw1, kb1, kw2, kb2 = jax.random.split(key, 5)

    x = jax.random.normal(kx, (B, in_dim), dtype=jnp.float32)

    # Deterministic parameter init (PyTorch-style uniform bounds).
    # Linear weights are pre-transposed to (in, out) so kernels do x @ W.
    bound1 = 1.0 / (in_dim ** 0.5)
    w1 = jax.random.uniform(kw1, (in_dim, hidden), jnp.float32, -bound1, bound1)
    b1 = jax.random.uniform(kb1, (1, hidden), jnp.float32, -bound1, bound1)
    gamma = jnp.ones((1, hidden), jnp.float32)
    beta = jnp.zeros((1, hidden), jnp.float32)
    bound2 = 1.0 / (hidden ** 0.5)
    w2 = jax.random.uniform(kw2, (hidden, out_dim), jnp.float32, -bound2, bound2)
    b2 = jax.random.uniform(kb2, (1, out_dim), jnp.float32, -bound2, bound2)

    out, emb = mlp_forward(x, w1, b1, gamma, beta, w2, b2)
    jax.block_until_ready((out, emb))

    ref_out, ref_emb = reference_forward(x, w1, b1, gamma, beta, w2, b2)
    assert out.shape == ref_out.shape and emb.shape == ref_emb.shape
    assert jnp.allclose(out, ref_out, atol=1e-4, rtol=1e-4)
    assert jnp.allclose(emb, ref_emb, atol=1e-4, rtol=1e-4)

    print("KERNEL_OK")
</pallas_src>

<mosaic_0001>
module attributes {stable_mosaic.version = 11 : i64} {
  func.func @linear1_stats_kernel(%arg0: i32, %arg1: memref<8x32xf32, #tpu.memory_space<vmem>>, %arg2: memref<32x128xf32, #tpu.memory_space<vmem>>, %arg3: memref<8x128xf32, #tpu.memory_space<vmem>>, %arg4: memref<1x128xf32, #tpu.memory_space<vmem>>, %arg5: memref<1x128xf32, #tpu.memory_space<vmem>>) attributes {dimension_semantics = [#tpu.dimension_semantics<arbitrary>], iteration_bounds = array<i64: 1>, scalar_prefetch = 0 : i64, scratch_operands = 0 : i64, tpu.core_type = #tpu.core_type<tc>, window_params = [{transform_indices = @transform_0, window_bounds = array<i64: 8, 32>}, {pipeline_mode = #tpu.pipeline_mode<synchronous>, transform_indices = @transform_1, window_bounds = array<i64: 32, 128>}, {transform_indices = @transform_2, window_bounds = array<i64: 8, 128>}, {pipeline_mode = #tpu.pipeline_mode<synchronous>, transform_indices = @transform_3, window_bounds = array<i64: 1, 128>}, {pipeline_mode = #tpu.pipeline_mode<synchronous>, transform_indices = @transform_4, window_bounds = array<i64: 1, 128>}]} {
    %c0_i32 = arith.constant 0 : i32
    %0 = arith.cmpi eq, %arg0, %c0_i32 : i32
    %1 = arith.extui %0 : i1 to i32
    %c0_i32_0 = arith.constant 0 : i32
    %2 = arith.cmpi ne, %1, %c0_i32_0 : i32
    scf.if %2 {
      %cst_16 = arith.constant 0.000000e+00 : f32
      %18 = vector.broadcast %cst_16 : f32 to vector<1x128xf32>
      %c0_17 = arith.constant 0 : index
      %c0_18 = arith.constant 0 : index
      %19 = vector.load %arg4[%c0_17, %c0_18] : memref<1x128xf32, #tpu.memory_space<vmem>>, vector<1x128xf32>
      tpu.vector_store %arg4[%c0_17, %c0_18], %18 {strides = array<i32>} : memref<1x128xf32, #tpu.memory_space<vmem>>, vector<1x128xf32>,
      %cst_19 = arith.constant 0.000000e+00 : f32
      %20 = vector.broadcast %cst_19 : f32 to vector<1x128xf32>
      %c0_20 = arith.constant 0 : index
      %c0_21 = arith.constant 0 : index
      %21 = vector.load %arg5[%c0_20, %c0_21] : memref<1x128xf32, #tpu.memory_space<vmem>>, vector<1x128xf32>
      tpu.vector_store %arg5[%c0_20, %c0_21], %20 {strides = array<i32>} : memref<1x128xf32, #tpu.memory_space<vmem>>, vector<1x128xf32>,
    } else {
    }
    %c0 = arith.constant 0 : index
    %c0_1 = arith.constant 0 : index
    %3 = vector.load %arg1[%c0, %c0_1] : memref<8x32xf32, #tpu.memory_space<vmem>>, vector<8x32xf32>
    %c0_2 = arith.constant 0 : index
    %c0_3 = arith.constant 0 : index
    %4 = vector.load %arg2[%c0_2, %c0_3] : memref<32x128xf32, #tpu.memory_space<vmem>>, vector<32x128xf32>
    %cst = arith.constant dense<0.000000e+00> : vector<8x128xf32>
    %5 = tpu.matmul %3, %4, %cst {dimension_numbers = #tpu.dot_dimension_numbers<[1], [0], [0], [1], [0, 0, 1, 1], [], []>} : vector<8x32xf32>, vector<32x128xf32>, vector<8x128xf32> -> vector<8x128xf32>
    %c0_4 = arith.constant 0 : index
    %c0_5 = arith.constant 0 : index
    %6 = vector.load %arg3[%c0_4, %c0_5] : memref<8x128xf32, #tpu.memory_space<vmem>>, vector<8x128xf32>
    tpu.vector_store %arg3[%c0_4, %c0_5], %5 {strides = array<i32>} : memref<8x128xf32, #tpu.memory_space<vmem>>, vector<8x128xf32>,
    %c0_6 = arith.constant 0 : index
    %c0_7 = arith.constant 0 : index
    %7 = vector.load %arg4[%c0_6, %c0_7] : memref<1x128xf32, #tpu.memory_space<vmem>>, vector<1x128xf32>
    %cst_8 = arith.constant dense<0.000000e+00> : vector<128xf32>
    %8 = vector.multi_reduction <add>, %5, %cst_8 [0] : vector<8x128xf32> to vector<128xf32>
    %9 = vector.shape_cast %8 : vector<128xf32> to vector<1x128xf32>
    %10 = arith.addf %7, %9 : vector<1x128xf32>
    %c0_9 = arith.constant 0 : index
    %c0_10 = arith.constant 0 : index
    %11 = vector.load %arg4[%c0_9, %c0_10] : memref<1x128xf32, #tpu.memory_space<vmem>>, vector<1x128xf32>
    tpu.vector_store %arg4[%c0_9, %c0_10], %10 {strides = array<i32>} : memref<1x128xf32, #tpu.memory_space<vmem>>, vector<1x128xf32>,
    %c0_11 = arith.constant 0 : index
    %c0_12 = arith.constant 0 : index
    %12 = vector.load %arg5[%c0_11, %c0_12] : memref<1x128xf32, #tpu.memory_space<vmem>>, vector<1x128xf32>
    %13 = arith.mulf %5, %5 : vector<8x128xf32>
    %cst_13 = arith.constant dense<0.000000e+00> : vector<128xf32>
    %14 = vector.multi_reduction <add>, %13, %cst_13 [0] : vector<8x128xf32> to vector<128xf32>
    %15 = vector.shape_cast %14 : vector<128xf32> to vector<1x128xf32>
    %16 = arith.addf %12, %15 : vector<1x128xf32>
    %c0_14 = arith.constant 0 : index
    %c0_15 = arith.constant 0 : index
    %17 = vector.load %arg5[%c0_14, %c0_15] : memref<1x128xf32, #tpu.memory_space<vmem>>, vector<1x128xf32>
    tpu.vector_store %arg5[%c0_14, %c0_15], %16 {strides = array<i32>} : memref<1x128xf32, #tpu.memory_space<vmem>>, vector<1x128xf32>,
    return
  }
  func.func @transform_0(%arg0: i32) -> (i32, i32) {
    %c0_i32 = arith.constant 0 : i32
    %c0_i32_0 = arith.constant 0 : i32
    return %arg0, %c0_i32 : i32, i32
  }
  func.func @transform_1(%arg0: i32) -> (i32, i32) {
    %c0_i32 = arith.constant 0 : i32
    %c0_i32_0 = arith.constant 0 : i32
    %c0_i32_1 = arith.constant 0 : i32
    return %c0_i32, %c0_i32_0 : i32, i32
  }
  func.func @transform_2(%arg0: i32) -> (i32, i32) {
    %c0_i32 = arith.constant 0 : i32
    %c0_i32_0 = arith.constant 0 : i32
    return %arg0, %c0_i32 : i32, i32
  }
  func.func @transform_3(%arg0: i32) -> (i32, i32) {
    %c0_i32 = arith.constant 0 : i32
    %c0_i32_0 = arith.constant 0 : i32
    %c0_i32_1 = arith.constant 0 : i32
    return %c0_i32, %c0_i32_0 : i32, i32
  }
  func.func @transform_4(%arg0: i32) -> (i32, i32) {
    %c0_i32 = arith.constant 0 : i32
    %c0_i32_0 = arith.constant 0 : i32
    %c0_i32_1 = arith.constant 0 : i32
    return %c0_i32, %c0_i32_0 : i32, i32
  }
}

</mosaic_0001>

<llo_original>
// kernel: tpu_custom_call.1
$region0: #{tpu_custom_call.1}
  #allocation0 [shape = 'u32[]', space=smem, size = 0x4, offset = 0x4, fixed_abs, tag = 'smem constant byte address 0x4 - core index']
  #allocation1 [shape = 'u32[144,128]{1,0:T(1,128)}', space=vmem, size = 0x12000, scoped, tag = 'internal scratch']
  %s0 = inlined_call_operand.hbm [shape: f32[8,32], index: 0, kind: input, shape index: {}]
  %s1 = inlined_call_operand.hbm [shape: f32[32,128], index: 1, kind: input, shape index: {}]
  %s2 = inlined_call_operand.hbm [shape: f32[8,128], index: 2, kind: output, shape index: {0}]
  %s3 = inlined_call_operand.hbm [shape: f32[1,128], index: 3, kind: output, shape index: {1}]
  %s4 = inlined_call_operand.hbm [shape: f32[1,128], index: 4, kind: output, shape index: {2}]
  %5 = xla_tuple %s2, %s3, %s4
  %s6 = sld [smem:[#allocation0]]
  $region46: #{tpu_custom_call.1} parent=0
    _
  %s8 = ssub.s32 1, %s6
  %s9 = scalar_select 0, %s8, %s6
  $region1: #{tpu_custom_call.1} parent=0
    #allocation2 [shape = 'u8[4096]{0}', space=vmem, size = 0x1000, scoped, tag = 'input window, operand 0, single buffered']
    #allocation3 [shape = 's32[1]{0}', space=sflag, size = 0x4, scoped, tag = 'scoped memory for tpu_custom_call.1']
    #allocation4 [shape = 's32[1]{0}', space=sflag, size = 0x4, scoped, tag = 'scoped memory for tpu_custom_call.1']
    #allocation5 [shape = 'u8[16384]{0}', space=vmem, size = 0x4000, scoped, tag = 'input window, operand 1, single buffered']
    #allocation6 [shape = 's32[1]{0}', space=sflag, size = 0x4, scoped, tag = 'scoped memory for tpu_custom_call.1']
    #allocation7 [shape = 'u8[4096]{0}', space=vmem, size = 0x1000, scoped, tag = 'output window, operand 0, single buffered']
    #allocation8 [shape = 'u8[512]{0}', space=vmem, size = 0x400, scoped, tag = 'output window, operand 1, single buffered']
    #allocation9 [shape = 's32[1]{0}', space=sflag, size = 0x4, scoped, tag = 'scoped memory for tpu_custom_call.1']
    #allocation10 [shape = 'u8[512]{0}', space=vmem, size = 0x400, scoped, tag = 'output window, operand 2, single buffered']
    %10 = vsyncpa [#allocation3], 0
    %11 = vsyncpa [#allocation6], 0
    %12 = vsyncpa [#allocation4], 0
    %13 = vsyncpa [#allocation9], 0
    // Predicated region
    $region2: #{tpu_custom_call.1} parent=1 // pred_check
      _
    $region3: #{tpu_custom_call.1} parent=1 // pred_check_branch
      %15 = sbr.rel (0) target = $region5
    $region4: #{tpu_custom_call.1} parent=1 // pred_region
      %s17 = ssub.s32 128, 128
      %18 = vsyncadd [#allocation3], %s17
      %s20 = sshll.u32 [#allocation2], 4
      %s21 = int_to_ptr.vmem [resolvable:$true] %s20
      %23 = dma.hbm_to_vmem [thread:$0]  %s0, 128, %s21, [#allocation3]
    $region5: #{tpu_custom_call.1} parent=1 // pred_fallthru
      _
    // Predicated region
    $region6: #{tpu_custom_call.1} parent=1 // pred_check
      _
    $region7: #{tpu_custom_call.1} parent=1 // pred_check_branch
      %25 = sbr.rel (0) target = $region9
    $region8: #{tpu_custom_call.1} parent=1 // pred_region
      %s27 = ssub.s32 512, 512
      %28 = vsyncadd [#allocation6], %s27
      %s29 = sshll.u32 [#allocation5], 4
      %s30 = int_to_ptr.vmem [resolvable:$true] %s29
      %35 = dma.hbm_to_vmem [thread:$0]  %s1, 512, %s30, [#allocation6], 128, 128, 8
    $region9: #{tpu_custom_call.1} parent=1 // pred_fallthru
      _
    // Predicated region
    $region10: #{tpu_custom_call.1} parent=1 // pred_check
      _
    $region11: #{tpu_custom_call.1} parent=1 // pred_check_branch
      %37 = sbr.rel (0) target = $region13
    $region12: #{tpu_custom_call.1} parent=1 // pred_region
      %38 = dma.done [#allocation3], 128
    $region13: #{tpu_custom_call.1} parent=1 // pred_fallthru
      _
    // Predicated region
    $region14: #{tpu_custom_call.1} parent=1 // pred_check
      _
    $region15: #{tpu_custom_call.1} parent=1 // pred_check_branch
      %40 = sbr.rel (0) target = $region17
    $region16: #{tpu_custom_call.1} parent=1 // pred_region
      %41 = dma.done [#allocation6], 512
    $region17: #{tpu_custom_call.1} parent=1 // pred_fallthru
      _
    %p42 = scmp.eq.s32.totalorder 0, 0
    // Predicated region
    $region18: #{tpu_custom_call.1} parent=1 // pred_check
      %p43 = pneg %p42
    $region19: #{tpu_custom_call.1} parent=1 // pred_check_branch
      %45 = sbr.rel (%p43) target = $region21
    $region20: #{tpu_custom_call.1} parent=1 // pred_region
      %46 = vst [vmem:[#allocation8] sm:$0x1] 0.0
      %47 = vst [vmem:[#allocation10] sm:$0x1] 0.0
    $region21: #{tpu_custom_call.1} parent=1 // pred_fallthru
      _
    %v48 = vld [vmem:[#allocation2] sm:$0xff]
    %v49 = vld [vmem:[#allocation5] sm:$0xff]
    %v50 = vld [vmem:[#allocation5 + $0x8] sm:$0xff]
    %v51 = vld [vmem:[#allocation5 + $0x10] sm:$0xff]
    %v52 = vld [vmem:[#allocation5 + $0x18] sm:$0xff]
    %vm53 = vcmask 261120
    %v55 = vsel %vm53, %v48, 0
    %57 = vmatprep.subr.mxu0 0.0
    %58 = vmatpush1.msra.mxu0 %v49
    %59 = vmatprep.subr.mxu0 0.0
    %60 = vmatpush1.msra.mxu0 %v50
    %61 = vmatprep.subr.mxu0 0.0
    %62 = vmatpush1.msra.mxu0 %v51
    %63 = vmatprep.subr.mxu0 0.0
    %64 = vmatpush1.msra.mxu0 %v52
    %65 = vmatprep.subr.mxu0 0.0
    %66 = vmatpush1.msra.mxu0 0.0
    %67 = vmatprep.subr.mxu0 0.0
    %68 = vmatpush1.msra.mxu0 0.0
    %69 = vmatprep.subr.mxu0 0.0
    %70 = vmatpush1.msra.mxu0 0.0
    %71 = vmatprep.subr.mxu0 0.0
    %72 = vmatpush1.msra.mxu0 0.0
    %73 = vmatprep.subr.mxu0 0.0
    %74 = vmatpush1.msra.mxu0 0.0
    %75 = vmatprep.subr.mxu0 0.0
    %76 = vmatpush1.msra.mxu0 0.0
    %77 = vmatprep.subr.mxu0 0.0
    %78 = vmatpush1.msra.mxu0 0.0
    %79 = vmatprep.subr.mxu0 0.0
    %80 = vmatpush1.msra.mxu0 0.0
    %81 = vmatprep.subr.mxu0 0.0
    %82 = vmatpush1.msra.mxu0 0.0
    %83 = vmatprep.subr.mxu0 0.0
    %84 = vmatpush1.msra.mxu0 0.0
    %85 = vmatprep.subr.mxu0 0.0
    %86 = vmatpush1.msra.mxu0 0.0
    %87 = vmatprep.subr.mxu0 0.0
    %88 = vmatpush1.msra.mxu0 0.0
    %89 = vmatprep.subr.mxu0 0.0
    %90 = vmatpush1.msra.mxu0 0.0
    %91 = vmatprep.subr.mxu0 0.0
    %92 = vmatpush1.msra.mxu0 0.0
    %93 = vmatprep.subr.mxu0 0.0
    %94 = vmatpush1.msra.mxu0 0.0
    %95 = vmatprep.subr.mxu0 0.0
    %96 = vmatpush1.msra.mxu0 0.0
    %97 = vmatprep.subr.mxu0 0.0
    %98 = vmatpush1.msra.mxu0 0.0
    %99 = vmatprep.subr.mxu0 0.0
    %100 = vmatpush1.msra.mxu0 0.0
    %101 = vmatprep.subr.mxu0 0.0
    %102 = vmatpush1.msra.mxu0 0.0
    %103 = vmatprep.subr.mxu0 0.0
    %104 = vmatpush1.msra.mxu0 0.0
    %105 = vmatprep.subr.mxu0 0.0
    %106 = vmatpush1.msra.mxu0 0.0
    %107 = vmatprep.subr.mxu0 0.0
    %108 = vmatpush1.msra.mxu0 0.0
    %109 = vmatprep.subr.mxu0 0.0
    %110 = vmatpush1.msra.mxu0 0.0
    %111 = vmatprep.subr.mxu0 0.0
    %112 = vmatpush1.msra.mxu0 0.0
    %113 = vmatprep.subr.mxu0 0.0
    %114 = vmatpush1.msra.mxu0 0.0
    %115 = vmatprep.subr.mxu0 0.0
    %116 = vmatpush1.msra.mxu0 0.0
    %117 = vmatprep.subr.mxu0 0.0
    %118 = vmatpush1.msra.mxu0 0.0
    %119 = vmatprep.subr.mxu0 0.0
    %120 = vmatpush1.msra.mxu0 0.0
    %121 = vmatprep.mubr.f32.mxu0 0.0
    %122 = vmatmul.mubr.f32.gmra.mrb[0].mxu0 %v55
    %v123 = vpop.f32.mrb[0].mxu0
    %v124 = vadd.f32 0.0, %v123
    %v125 = vpop.f32.mrb[0].mxu0
    %126 = vdwg.mxu0
    %127 = vst [vmem:[#allocation7] sm:$0xff] %v124
    %v128 = vld [vmem:[#allocation8] sm:$0x1]
    %v129 = vrot.slane %v124, 4
    %v130 = vadd.f32 %v124, %v129
    %v131 = vrot.slane %v130, 2
    %v132 = vadd.f32 %v130, %v131
    %v133 = vrot.slane %v132, 1
    %v134 = vadd.f32 %v132, %v133
    %v135 = vadd.f32 %v128, %v134
    %136 = vst [vmem:[#allocation8] sm:$0x1] %v135
    %v137 = vld [vmem:[#allocation10] sm:$0x1]
    %v138 = vmul.f32 %v124, %v124
    %v139 = vrot.slane %v138, 4
    %v140 = vadd.f32 %v138, %v139
    %v141 = vrot.slane %v140, 2
    %v142 = vadd.f32 %v140, %v141
    %v143 = vrot.slane %v142, 1
    %v144 = vadd.f32 %v142, %v143
    %v145 = vadd.f32 %v137, %v144
    %146 = vst [vmem:[#allocation10] sm:$0x1] %v145
    // Predicated region
    $region22: #{tpu_custom_call.1} parent=1 // pred_check
      _
    $region23: #{tpu_custom_call.1} parent=1 // pred_check_branch
      %148 = sbr.rel (0) target = $region25
    $region24: #{tpu_custom_call.1} parent=1 // pred_region
      %s150 = ssub.s32 128, 128
      %151 = vsyncadd [#allocation4], %s150
      %s153 = sshll.u32 [#allocation7], 4
      %s154 = int_to_ptr.vmem [resolvable:$true] %s153
      %156 = dma.vmem_to_hbm [thread:$0]  %s154, 128, %s2, [#allocation4]
    $region25: #{tpu_custom_call.1} parent=1 // pred_fallthru
      _
    // Predicated region
    $region26: #{tpu_custom_call.1} parent=1 // pred_check
      _
    $region27: #{tpu_custom_call.1} parent=1 // pred_check_branch
      %158 = sbr.rel (0) target = $region29
    $region28: #{tpu_custom_call.1} parent=1 // pred_region
      %s160 = ssub.s32 16, 16
      %161 = vsyncadd [#allocation9], %s160
      %s163 = sshll.u32 [#allocation8], 4
      %s164 = int_to_ptr.vmem [resolvable:$true] %s163
      %166 = dma.vmem_to_hbm [thread:$0]  %s164, 16, %s3, [#allocation9]
    $region29: #{tpu_custom_call.1} parent=1 // pred_fallthru
      _
    // Predicated region
    $region30: #{tpu_custom_call.1} parent=1 // pred_check
      _
    $region31: #{tpu_custom_call.1} parent=1 // pred_check_branch
      %168 = sbr.rel (0) target = $region33
    $region32: #{tpu_custom_call.1} parent=1 // pred_region
      %s170 = ssub.s32 16, 16
      %171 = vsyncadd [#allocation9], %s170
      %s173 = sshll.u32 [#allocation10], 4
      %s174 = int_to_ptr.vmem [resolvable:$true] %s173
      %176 = dma.vmem_to_hbm [thread:$0]  %s174, 16, %s4, [#allocation9]
    $region33: #{tpu_custom_call.1} parent=1 // pred_fallthru
      _
    // Predicated region
    $region34: #{tpu_custom_call.1} parent=1 // pred_check
      _
    $region35: #{tpu_custom_call.1} parent=1 // pred_check_branch
      %178 = sbr.rel (0) target = $region37
    $region36: #{tpu_custom_call.1} parent=1 // pred_region
      %179 = dma.done [#allocation4], 128
    $region37: #{tpu_custom_call.1} parent=1 // pred_fallthru
      _
    // Predicated region
    $region38: #{tpu_custom_call.1} parent=1 // pred_check
      _
    $region39: #{tpu_custom_call.1} parent=1 // pred_check_branch
      %181 = sbr.rel (0) target = $region41
    $region40: #{tpu_custom_call.1} parent=1 // pred_region
      %182 = dma.done [#allocation9], 16
    $region41: #{tpu_custom_call.1} parent=1 // pred_fallthru
      _
    // Predicated region
    $region42: #{tpu_custom_call.1} parent=1 // pred_check
      _
    $region43: #{tpu_custom_call.1} parent=1 // pred_check_branch
      %184 = sbr.rel (0) target = $region45
    $region44: #{tpu_custom_call.1} parent=1 // pred_region
      %185 = dma.done [#allocation9], 16
    $region45: #{tpu_custom_call.1} parent=1 // pred_fallthru
      _
    %186 = vsyncpa [#allocation3], 1
    %187 = vsyncpa [#allocation6], 1
    %188 = vsyncpa [#allocation4], 1
    %189 = vsyncpa [#allocation9], 1

</llo_original>
